<compile_context>
chip_gen: v7x
topology: tpu7x:2x2x1
jax: 0.10.0
libtpu: 0.0.40
codegen_flags: <defaults>
</compile_context>

<pallas_src>
import functools

import jax
import jax.numpy as jnp
from jax.experimental import pallas as pl
from jax.experimental.pallas import tpu as pltpu


def _round_up(x, m):
    return ((x + m - 1) // m) * m


def _critic_kernel(s_ref, a_ref, w1s_ref, w1a_ref, b1_ref,
                   w2_ref, b2_ref, w3_ref, b3_ref, q_ref):
    """One batch tile of the 3-layer MLP. Weights f32 or bf16; accumulation f32."""
    w_dtype = w2_ref.dtype

    # Layer 1: cat([state, action], 1) @ W1 + b1, fused as two MXU matmuls.
    h1 = (jnp.dot(s_ref[...].astype(w_dtype), w1s_ref[...],
                  preferred_element_type=jnp.float32)
          + jnp.dot(a_ref[...].astype(w_dtype), w1a_ref[...],
                    preferred_element_type=jnp.float32)
          + b1_ref[...])
    h1 = jnp.maximum(h1, 0.0)          # ReLU in f32 (VPU)

    # Layer 2
    h2 = (jnp.dot(h1.astype(w_dtype), w2_ref[...],
                  preferred_element_type=jnp.float32)
          + b2_ref[...])
    h2 = jnp.maximum(h2, 0.0)

    # Layer 3 (no activation). Output kept at the true out_dim width -> tiny
    # (masked) store instead of a 128-lane-padded writeback.
    q = (jnp.dot(h2.astype(w_dtype), w3_ref[...],
                 preferred_element_type=jnp.float32)
         + b3_ref[...])
    q_ref[...] = q.astype(q_ref.dtype)


def _choose_batch_tile(batch, tile_b):
    """Batch tile: multiple of 8 sublanes, capped at tile_b, and >=2 grid steps
    for large batches so v7x can shard the 'parallel' axis over its 2 TCs."""
    rb = _round_up(max(int(batch), 1), 8)
    tb = max(8, min(_round_up(int(tile_b), 8), rb))
    if rb >= 16 and -(-rb // tb) < 2:          # grid would collapse to 1 step
        tb = max(8, _round_up(-(-rb // 2), 8))
    return tb


@functools.partial(jax.jit, static_argnames=("tile_b",))
def critic_forward(state, action, kernel_params, *, tile_b=1024):
    """Pallas-backed Critic.forward(state, action).

    `kernel_params` must come from `prepare_critic_params` (pre-split W1,
    lane-padded hiddens, biases as (1, H))."""
    w1_s, w1_a, b1, w2, b2, w3, b3 = kernel_params
    batch, state_dim = state.shape
    action_dim = action.shape[1]
    h1p = w2.shape[0]
    h2p = w3.shape[0]
    out_dim = w3.shape[1]

    tb = _choose_batch_tile(batch, tile_b)
    padded_batch = _round_up(batch, tb)
    if padded_batch != batch:
        # TODO(synk): handle the ragged last tile in-kernel (pl.when + masked
        # store) instead of padding, to avoid the extra HBM round-trip of the
        # inputs on very large ragged batches.
        pad = padded_batch - batch
        state = jnp.pad(state, ((0, pad), (0, 0)))
        action = jnp.pad(action, ((0, pad), (0, 0)))
    grid = (padded_batch // tb,)

    weight_bytes = sum(int(x.size) * x.dtype.itemsize
                       for x in (w1_s, w1_a, b1, w2, b2, w3, b3))
    io_tile_bytes = tb * (state_dim + action_dim + out_dim) * 4
    scratch_bytes = tb * (h1p + h2p) * 6       # f32 intermediates + bf16 copies
    vmem_limit = int(min(max(weight_bytes + 4 * io_tile_bytes
                             + 2 * scratch_bytes + (4 << 20),
                             16 << 20),
                         48 << 20))            # stay well under v7x's 64 MiB

    flops = 2 * padded_batch * (state_dim * h1p + action_dim * h1p
                                + h1p * h2p + h2p * out_dim)
    # Honest DMA traffic: f32 inputs + true-width f32 output + weights once.
    bytes_accessed = (weight_bytes
                      + padded_batch * (state_dim + action_dim + out_dim) * 4)

    def resident(shape):
        # Constant block index -> fetched once and kept resident; Buffered(1)
        # drops the (dead) second pipeline buffer to free VMEM.
        return pl.BlockSpec(shape, lambda i: (0, 0),
                            pipeline_mode=pl.Buffered(buffer_count=1))

    q = pl.pallas_call(
        _critic_kernel,
        out_shape=jax.ShapeDtypeStruct((padded_batch, out_dim), jnp.float32),
        grid=grid,
        in_specs=[
            pl.BlockSpec((tb, state_dim), lambda i: (i, 0)),
            pl.BlockSpec((tb, action_dim), lambda i: (i, 0)),
            resident(w1_s.shape),
            resident(w1_a.shape),
            resident(b1.shape),
            resident(w2.shape),
            resident(b2.shape),
            resident(w3.shape),
            resident(b3.shape),
        ],
        # Block last dim == full array last dim (out_dim), so this is legal and
        # avoids writing a 128-lane-padded Q to HBM.
        out_specs=pl.BlockSpec((tb, out_dim), lambda i: (i, 0)),
        compiler_params=pltpu.CompilerParams(
            dimension_semantics=("parallel",),   # v7x: shard batch tiles over 2 TCs
            vmem_limit_bytes=vmem_limit),
        cost_estimate=pl.CostEstimate(
            flops=flops, transcendentals=0, bytes_accessed=bytes_accessed),
    )(state, action, w1_s, w1_a, b1, w2, b2, w3, b3)

    return q[:batch]


def init_critic_params(key, state_dim, action_dim,
                       hidden_dim1=400, hidden_dim2=300, out_dim=1):
    """nn.Linear-style init U(-1/sqrt(fan_in), 1/sqrt(fan_in)).
    Weights stored as (in_features, out_features) (transposed vs torch)."""
    def linear_init(k, fan_in, fan_out):
        kw, kb = jax.random.split(k)
        bound = 1.0 / jnp.sqrt(fan_in)
        w = jax.random.uniform(kw, (fan_in, fan_out), jnp.float32, -bound, bound)
        b = jax.random.uniform(kb, (fan_out,), jnp.float32, -bound, bound)
        return w, b

    k1, k2, k3 = jax.random.split(key, 3)
    w1, b1 = linear_init(k1, state_dim + action_dim, hidden_dim1)
    w2, b2 = linear_init(k2, hidden_dim1, hidden_dim2)
    w3, b3 = linear_init(k3, hidden_dim2, out_dim)
    return (w1, b1, w2, b2, w3, b3)


def prepare_critic_params(params, state_dim, *, weights_dtype=jnp.bfloat16,
                          lane_multiple=128):
    """One-time (outside jit) param prep: split W1 for the fused concat,
    zero-pad HIDDEN dims to lane multiples (output dim stays at out_dim),
    reshape biases to (1, H), cast weights to bf16 by default (f32 opt-in).
    Padding is mathematically inert (zero cols + zero bias -> ReLU(0)=0)."""
    w1, b1, w2, b2, w3, b3 = params
    h1, h2, out_dim = w1.shape[1], w2.shape[1], w3.shape[1]
    h1p = _round_up(h1, lane_multiple)
    h2p = _round_up(h2, lane_multiple)

    def pad2(w, rows, cols):
        return jnp.pad(w, ((0, rows - w.shape[0]), (0, cols - w.shape[1])))

    def pad_bias(b, cols):
        return jnp.pad(b, (0, cols - b.shape[0])).reshape(1, cols)

    w1p = pad2(w1, w1.shape[0], h1p)
    w1_s = w1p[:state_dim, :].astype(weights_dtype)
    w1_a = w1p[state_dim:, :].astype(weights_dtype)
    return (w1_s, w1_a,
            pad_bias(b1, h1p).astype(jnp.float32),
            pad2(w2, h1p, h2p).astype(weights_dtype),
            pad_bias(b2, h2p).astype(jnp.float32),
            pad2(w3, h2p, out_dim).astype(weights_dtype),   # rows padded, cols = out_dim
            b3.reshape(1, out_dim).astype(jnp.float32))


def critic_forward_ref(state, action, params):
    """Pure-JAX reference (mirrors the PyTorch module exactly)."""
    w1, b1, w2, b2, w3, b3 = params
    inp = jnp.concatenate([state, action], axis=1)
    q = jnp.maximum(inp @ w1 + b1, 0.0)
    q = jnp.maximum(q @ w2 + b2, 0.0)
    return q @ w3 + b3


if __name__ == "__main__":
    # Small shapes consistent with the module: batch=8 rows of (state, action).
    batch, state_dim, action_dim = 8, 16, 8
    hidden_dim1, hidden_dim2, out_dim = 64, 32, 1

    key = jax.random.PRNGKey(0)
    kp, ks, ka = jax.random.split(key, 3)

    raw_params = init_critic_params(kp, state_dim, action_dim,
                                    hidden_dim1, hidden_dim2, out_dim)
    state = jax.random.normal(ks, (batch, state_dim), jnp.float32)
    action = jax.random.normal(ka, (batch, action_dim), jnp.float32)

    q_ref = critic_forward_ref(state, action, raw_params)

    # f32 weights: must match the reference tightly.
    kparams_f32 = prepare_critic_params(raw_params, state_dim,
                                        weights_dtype=jnp.float32)
    q = jax.block_until_ready(critic_forward(state, action, kparams_f32))
    assert q.shape == (batch, out_dim)
    assert jnp.allclose(q, q_ref, atol=1e-5, rtol=1e-5), "f32 mismatch vs reference"

    # bf16 weights (default; halves weight DMA, native-rate MXU): f32
    # accumulation keeps it close, but only to ~1e-1 vs the f32 reference.
    kparams_bf16 = prepare_critic_params(raw_params, state_dim)
    q_b = jax.block_until_ready(critic_forward(state, action, kparams_bf16))
    assert q_b.shape == (batch, out_dim)
    assert jnp.allclose(q_b, q_ref, atol=1e-1, rtol=1e-1), "bf16 mismatch vs reference"

    print("KERNEL_OK")
</pallas_src>

<mosaic_0001>
module attributes {stable_mosaic.version = 11 : i64} {
  func.func @_critic_kernel(%arg0: i32, %arg1: memref<8x16xf32, #tpu.memory_space<vmem>>, %arg2: memref<8x8xf32, #tpu.memory_space<vmem>>, %arg3: memref<16x128xf32, #tpu.memory_space<vmem>>, %arg4: memref<8x128xf32, #tpu.memory_space<vmem>>, %arg5: memref<1x128xf32, #tpu.memory_space<vmem>>, %arg6: memref<128x128xf32, #tpu.memory_space<vmem>>, %arg7: memref<1x128xf32, #tpu.memory_space<vmem>>, %arg8: memref<128x1xf32, #tpu.memory_space<vmem>>, %arg9: memref<1x1xf32, #tpu.memory_space<vmem>>, %arg10: memref<8x1xf32, #tpu.memory_space<vmem>>) attributes {dimension_semantics = [#tpu.dimension_semantics<parallel>], iteration_bounds = array<i64: 1>, scalar_prefetch = 0 : i64, scratch_operands = 0 : i64, tpu.core_type = #tpu.core_type<tc>, window_params = [{transform_indices = @transform_0, window_bounds = array<i64: 8, 16>}, {transform_indices = @transform_1, window_bounds = array<i64: 8, 8>}, {pipeline_mode = #tpu.pipeline_mode<synchronous>, transform_indices = @transform_2, window_bounds = array<i64: 16, 128>}, {pipeline_mode = #tpu.pipeline_mode<synchronous>, transform_indices = @transform_3, window_bounds = array<i64: 8, 128>}, {pipeline_mode = #tpu.pipeline_mode<synchronous>, transform_indices = @transform_4, window_bounds = array<i64: 1, 128>}, {pipeline_mode = #tpu.pipeline_mode<synchronous>, transform_indices = @transform_5, window_bounds = array<i64: 128, 128>}, {pipeline_mode = #tpu.pipeline_mode<synchronous>, transform_indices = @transform_6, window_bounds = array<i64: 1, 128>}, {pipeline_mode = #tpu.pipeline_mode<synchronous>, transform_indices = @transform_7, window_bounds = array<i64: 128, 1>}, {pipeline_mode = #tpu.pipeline_mode<synchronous>, transform_indices = @transform_8, window_bounds = array<i64: 1, 1>}, {transform_indices = @transform_9, window_bounds = array<i64: 8, 1>}]} {
    %c0 = arith.constant 0 : index
    %c0_0 = arith.constant 0 : index
    %0 = vector.load %arg1[%c0, %c0_0] : memref<8x16xf32, #tpu.memory_space<vmem>>, vector<8x16xf32>
    %c0_1 = arith.constant 0 : index
    %c0_2 = arith.constant 0 : index
    %1 = vector.load %arg3[%c0_1, %c0_2] : memref<16x128xf32, #tpu.memory_space<vmem>>, vector<16x128xf32>
    %cst = arith.constant dense<0.000000e+00> : vector<8x128xf32>
    %2 = tpu.matmul %0, %1, %cst {dimension_numbers = #tpu.dot_dimension_numbers<[1], [0], [0], [1], [0, 0, 1, 1], [], []>} : vector<8x16xf32>, vector<16x128xf32>, vector<8x128xf32> -> vector<8x128xf32>
    %c0_3 = arith.constant 0 : index
    %c0_4 = arith.constant 0 : index
    %3 = vector.load %arg2[%c0_3, %c0_4] : memref<8x8xf32, #tpu.memory_space<vmem>>, vector<8x8xf32>
    %c0_5 = arith.constant 0 : index
    %c0_6 = arith.constant 0 : index
    %4 = vector.load %arg4[%c0_5, %c0_6] : memref<8x128xf32, #tpu.memory_space<vmem>>, vector<8x128xf32>
    %cst_7 = arith.constant dense<0.000000e+00> : vector<8x128xf32>
    %5 = tpu.matmul %3, %4, %cst_7 {dimension_numbers = #tpu.dot_dimension_numbers<[1], [0], [0], [1], [0, 0, 1, 1], [], []>} : vector<8x8xf32>, vector<8x128xf32>, vector<8x128xf32> -> vector<8x128xf32>
    %6 = arith.addf %2, %5 : vector<8x128xf32>
    %c0_8 = arith.constant 0 : index
    %c0_9 = arith.constant 0 : index
    %7 = vector.load %arg5[%c0_8, %c0_9] : memref<1x128xf32, #tpu.memory_space<vmem>>, vector<1x128xf32>
    %8 = vector.broadcast %7 : vector<1x128xf32> to vector<8x128xf32>
    %9 = arith.addf %6, %8 : vector<8x128xf32>
    %cst_10 = arith.constant 0.000000e+00 : f32
    %10 = vector.broadcast %cst_10 : f32 to vector<8x128xf32>
    %11 = arith.maximumf %9, %10 : vector<8x128xf32>
    %c0_11 = arith.constant 0 : index
    %c0_12 = arith.constant 0 : index
    %12 = vector.load %arg6[%c0_11, %c0_12] : memref<128x128xf32, #tpu.memory_space<vmem>>, vector<128x128xf32>
    %cst_13 = arith.constant dense<0.000000e+00> : vector<8x128xf32>
    %13 = tpu.matmul %11, %12, %cst_13 {dimension_numbers = #tpu.dot_dimension_numbers<[1], [0], [0], [1], [0, 0, 1, 1], [], []>} : vector<8x128xf32>, vector<128x128xf32>, vector<8x128xf32> -> vector<8x128xf32>
    %c0_14 = arith.constant 0 : index
    %c0_15 = arith.constant 0 : index
    %14 = vector.load %arg7[%c0_14, %c0_15] : memref<1x128xf32, #tpu.memory_space<vmem>>, vector<1x128xf32>
    %15 = vector.broadcast %14 : vector<1x128xf32> to vector<8x128xf32>
    %16 = arith.addf %13, %15 : vector<8x128xf32>
    %cst_16 = arith.constant 0.000000e+00 : f32
    %17 = vector.broadcast %cst_16 : f32 to vector<8x128xf32>
    %18 = arith.maximumf %16, %17 : vector<8x128xf32>
    %c0_17 = arith.constant 0 : index
    %c0_18 = arith.constant 0 : index
    %19 = vector.load %arg8[%c0_17, %c0_18] : memref<128x1xf32, #tpu.memory_space<vmem>>, vector<128x1xf32>
    %cst_19 = arith.constant dense<0.000000e+00> : vector<8x1xf32>
    %20 = tpu.matmul %18, %19, %cst_19 {dimension_numbers = #tpu.dot_dimension_numbers<[1], [0], [0], [1], [0, 0, 1, 1], [], []>} : vector<8x128xf32>, vector<128x1xf32>, vector<8x1xf32> -> vector<8x1xf32>
    %c0_20 = arith.constant 0 : index
    %c0_21 = arith.constant 0 : index
    %21 = vector.load %arg9[%c0_20, %c0_21] : memref<1x1xf32, #tpu.memory_space<vmem>>, vector<1x1xf32>
    %22 = vector.broadcast %21 : vector<1x1xf32> to vector<8x1xf32>
    %23 = arith.addf %20, %22 : vector<8x1xf32>
    %c0_22 = arith.constant 0 : index
    %c0_23 = arith.constant 0 : index
    %24 = vector.load %arg10[%c0_22, %c0_23] : memref<8x1xf32, #tpu.memory_space<vmem>>, vector<8x1xf32>
    tpu.vector_store %arg10[%c0_22, %c0_23], %23 {strides = array<i32>} : memref<8x1xf32, #tpu.memory_space<vmem>>, vector<8x1xf32>,
    return
  }
  func.func @transform_0(%arg0: i32) -> (i32, i32) {
    %c0_i32 = arith.constant 0 : i32
    %c0_i32_0 = arith.constant 0 : i32
    return %arg0, %c0_i32 : i32, i32
  }
  func.func @transform_1(%arg0: i32) -> (i32, i32) {
    %c0_i32 = arith.constant 0 : i32
    %c0_i32_0 = arith.constant 0 : i32
    return %arg0, %c0_i32 : i32, i32
  }
  func.func @transform_2(%arg0: i32) -> (i32, i32) {
    %c0_i32 = arith.constant 0 : i32
    %c0_i32_0 = arith.constant 0 : i32
    %c0_i32_1 = arith.constant 0 : i32
    return %c0_i32, %c0_i32_0 : i32, i32
  }
  func.func @transform_3(%arg0: i32) -> (i32, i32) {
    %c0_i32 = arith.constant 0 : i32
    %c0_i32_0 = arith.constant 0 : i32
    %c0_i32_1 = arith.constant 0 : i32
    return %c0_i32, %c0_i32_0 : i32, i32
  }
  func.func @transform_4(%arg0: i32) -> (i32, i32) {
    %c0_i32 = arith.constant 0 : i32
    %c0_i32_0 = arith.constant 0 : i32
    %c0_i32_1 = arith.constant 0 : i32
    return %c0_i32, %c0_i32_0 : i32, i32
  }
  func.func @transform_5(%arg0: i32) -> (i32, i32) {
    %c0_i32 = arith.constant 0 : i32
    %c0_i32_0 = arith.constant 0 : i32
    %c0_i32_1 = arith.constant 0 : i32
    return %c0_i32, %c0_i32_0 : i32, i32
  }
  func.func @transform_6(%arg0: i32) -> (i32, i32) {
    %c0_i32 = arith.constant 0 : i32
    %c0_i32_0 = arith.constant 0 : i32
    %c0_i32_1 = arith.constant 0 : i32
    return %c0_i32, %c0_i32_0 : i32, i32
  }
  func.func @transform_7(%arg0: i32) -> (i32, i32) {
    %c0_i32 = arith.constant 0 : i32
    %c0_i32_0 = arith.constant 0 : i32
    %c0_i32_1 = arith.constant 0 : i32
    return %c0_i32, %c0_i32_0 : i32, i32
  }
  func.func @transform_8(%arg0: i32) -> (i32, i32) {
    %c0_i32 = arith.constant 0 : i32
    %c0_i32_0 = arith.constant 0 : i32
    %c0_i32_1 = arith.constant 0 : i32
    return %c0_i32, %c0_i32_0 : i32, i32
  }
  func.func @transform_9(%arg0: i32) -> (i32, i32) {
    %c0_i32 = arith.constant 0 : i32
    %c0_i32_0 = arith.constant 0 : i32
    return %arg0, %c0_i32 : i32, i32
  }
}

</mosaic_0001>

<llo_original>
// kernel: critic_forward.1
$region0: #{critic_forward.1}
  #allocation0 [shape = 'u32[]', space=smem, size = 0x4, offset = 0x4, fixed_abs, tag = 'smem constant byte address 0x4 - core index']
  #allocation1 [shape = 'u32[144,128]{1,0:T(1,128)}', space=vmem, size = 0x12000, scoped, tag = 'internal scratch']
  #allocation2 [shape = 'f32[1,1]{1,0:T(1,128)S(1)}', space=vmem, size = 0x200, scoped, tag = 'scoped memory for critic_forward.1']
  %s0 = inlined_call_operand.hbm [shape: f32[8,16], index: 0, kind: input, shape index: {}]
  %s1 = inlined_call_operand.hbm [shape: f32[8,8], index: 1, kind: input, shape index: {}]
  %s2 = inlined_call_operand.vmem [shape: f32[16,128], index: 2, kind: input, shape index: {}]
  %s3 = inlined_call_operand.hbm [shape: f32[8,128], index: 3, kind: input, shape index: {}]
  %s4 = inlined_call_operand.vmem [shape: f32[1,128], index: 4, kind: input, shape index: {}]
  %s5 = inlined_call_operand.vmem [shape: f32[128,128], index: 5, kind: input, shape index: {}]
  %s6 = inlined_call_operand.vmem [shape: f32[1,128], index: 6, kind: input, shape index: {}]
  %s7 = inlined_call_operand.vmem [shape: f32[128,1], index: 7, kind: input, shape index: {}]
  %s8 = inlined_call_operand.<no memory space> [shape: f32[1,1], index: 8, kind: input, shape index: {}]
  %s9 = inlined_call_operand.vmem [shape: f32[8,1], index: 9, kind: output, shape index: {}]
  %s10 = sld [smem:[#allocation0]]
  $region58: #{critic_forward.1} parent=0
    _
  %s12 = ssub.s32 1, %s10
  %s13 = scalar_select 0, %s12, %s10
  %v14 = vstv %s8
  %15 = vst [vmem:[#allocation2] sm:$0x1] %v14
  $region1: #{critic_forward.1} parent=0
    #allocation3 [shape = 'u8[4096]{0}', space=vmem, size = 0x1000, scoped, tag = 'input window, operand 0, single buffered']
    #allocation4 [shape = 's32[1]{0}', space=sflag, size = 0x4, scoped, tag = 'scoped memory for critic_forward.1']
    #allocation5 [shape = 'u8[4096]{0}', space=vmem, size = 0x1000, scoped, tag = 'input window, operand 1, single buffered']
    #allocation6 [shape = 's32[1]{0}', space=sflag, size = 0x4, scoped, tag = 'scoped memory for critic_forward.1']
    #allocation7 [shape = 'u8[4096]{0}', space=vmem, size = 0x1000, scoped, tag = 'input window, operand 3, single buffered']
    %16 = vsyncpa [#allocation4], 0
    %17 = vsyncpa [#allocation6], 0
    // Predicated region
    $region2: #{critic_forward.1} parent=1 // pred_check
      _
    $region3: #{critic_forward.1} parent=1 // pred_check_branch
      %19 = sbr.rel (0) target = $region5
    $region4: #{critic_forward.1} parent=1 // pred_region
      %s21 = ssub.s32 128, 128
      %22 = vsyncadd [#allocation4], %s21
      %s24 = sshll.u32 [#allocation3], 4
      %s25 = int_to_ptr.vmem [resolvable:$true] %s24
      %27 = dma.hbm_to_vmem [thread:$0]  %s0, 128, %s25, [#allocation4]
    $region5: #{critic_forward.1} parent=1 // pred_fallthru
      _
    // Predicated region
    $region6: #{critic_forward.1} parent=1 // pred_check
      _
    $region7: #{critic_forward.1} parent=1 // pred_check_branch
      %29 = sbr.rel (0) target = $region9
    $region8: #{critic_forward.1} parent=1 // pred_region
      %s31 = ssub.s32 128, 128
      %32 = vsyncadd [#allocation6], %s31
      %s34 = sshll.u32 [#allocation5], 4
      %s35 = int_to_ptr.vmem [resolvable:$true] %s34
      %37 = dma.hbm_to_vmem [thread:$0]  %s1, 128, %s35, [#allocation6]
    $region9: #{critic_forward.1} parent=1 // pred_fallthru
      _
    // Predicated region
    $region10: #{critic_forward.1} parent=1 // pred_check
      _
    $region11: #{critic_forward.1} parent=1 // pred_check_branch
      %39 = sbr.rel (0) target = $region13
    $region12: #{critic_forward.1} parent=1 // pred_region
      _
    $region13: #{critic_forward.1} parent=1 // pred_fallthru
      _
    // Predicated region
    $region14: #{critic_forward.1} parent=1 // pred_check
      _
    $region15: #{critic_forward.1} parent=1 // pred_check_branch
      %41 = sbr.rel (0) target = $region17
    $region16: #{critic_forward.1} parent=1 // pred_region
      %s43 = ssub.s32 128, 128
      %44 = vsyncadd [#allocation6], %s43
      %s46 = sshll.u32 [#allocation7], 4
      %s47 = int_to_ptr.vmem [resolvable:$true] %s46
      %49 = dma.hbm_to_vmem [thread:$0]  %s3, 128, %s47, [#allocation6]
    $region17: #{critic_forward.1} parent=1 // pred_fallthru
      _
    // Predicated region
    $region18: #{critic_forward.1} parent=1 // pred_check
      _
    $region19: #{critic_forward.1} parent=1 // pred_check_branch
      %51 = sbr.rel (0) target = $region21
    $region20: #{critic_forward.1} parent=1 // pred_region
      _
    $region21: #{critic_forward.1} parent=1 // pred_fallthru
      _
    // Predicated region
    $region22: #{critic_forward.1} parent=1 // pred_check
      _
    $region23: #{critic_forward.1} parent=1 // pred_check_branch
      %53 = sbr.rel (0) target = $region25
    $region24: #{critic_forward.1} parent=1 // pred_region
      _
    $region25: #{critic_forward.1} parent=1 // pred_fallthru
      _
    // Predicated region
    $region26: #{critic_forward.1} parent=1 // pred_check
      _
    $region27: #{critic_forward.1} parent=1 // pred_check_branch
      %55 = sbr.rel (0) target = $region29
    $region28: #{critic_forward.1} parent=1 // pred_region
      _
    $region29: #{critic_forward.1} parent=1 // pred_fallthru
      _
    // Predicated region
    $region30: #{critic_forward.1} parent=1 // pred_check
      _
    $region31: #{critic_forward.1} parent=1 // pred_check_branch
      %57 = sbr.rel (0) target = $region33
    $region32: #{critic_forward.1} parent=1 // pred_region
      _
    $region33: #{critic_forward.1} parent=1 // pred_fallthru
      _
    // Predicated region
    $region34: #{critic_forward.1} parent=1 // pred_check
      _
    $region35: #{critic_forward.1} parent=1 // pred_check_branch
      %59 = sbr.rel (0) target = $region37
    $region36: #{critic_forward.1} parent=1 // pred_region
      _
    $region37: #{critic_forward.1} parent=1 // pred_fallthru
      _
    // Predicated region
    $region38: #{critic_forward.1} parent=1 // pred_check
      _
    $region39: #{critic_forward.1} parent=1 // pred_check_branch
      %61 = sbr.rel (0) target = $region41
    $region40: #{critic_forward.1} parent=1 // pred_region
      %62 = dma.done [#allocation4], 128
    $region41: #{critic_forward.1} parent=1 // pred_fallthru
      _
    // Predicated region
    $region42: #{critic_forward.1} parent=1 // pred_check
      _
    $region43: #{critic_forward.1} parent=1 // pred_check_branch
      %64 = sbr.rel (0) target = $region45
    $region44: #{critic_forward.1} parent=1 // pred_region
      %65 = dma.done [#allocation6], 128
    $region45: #{critic_forward.1} parent=1 // pred_fallthru
      _
    // Predicated region
    $region46: #{critic_forward.1} parent=1 // pred_check
      _
    $region47: #{critic_forward.1} parent=1 // pred_check_branch
      %67 = sbr.rel (0) target = $region49
    $region48: #{critic_forward.1} parent=1 // pred_region
      %68 = dma.done [#allocation6], 128
    $region49: #{critic_forward.1} parent=1 // pred_fallthru
      _
    %v69 = vld [vmem:[#allocation3] sm:$0xff]
    %v70 = vld [vmem:[%s2] sm:$0xff]
    %v71 = vld [vmem:[%s2 + $0x8] sm:$0xff]
    %v72 = vld [vmem:[#allocation5] sm:$0xff]
    %v73 = vld [vmem:[#allocation7] sm:$0xff]
    %vm74 = vcmask 64512
    %v76 = vsel %vm74, %v72, 0
    %78 = vmatprep.subr.mxu0 0.0
    %79 = vmatpush1.msra.mxu0 %v73
    %80 = vmatprep.subr.mxu0 0.0
    %81 = vmatpush1.msra.mxu0 0.0
    %82 = vmatprep.subr.mxu0 0.0
    %83 = vmatpush1.msra.mxu0 0.0
    %84 = vmatprep.subr.mxu0 0.0
    %85 = vmatpush1.msra.mxu0 0.0
    %86 = vmatprep.subr.mxu0 0.0
    %87 = vmatpush1.msra.mxu0 0.0
    %88 = vmatprep.subr.mxu0 0.0
    %89 = vmatpush1.msra.mxu0 0.0
    %90 = vmatprep.subr.mxu0 0.0
    %91 = vmatpush1.msra.mxu0 0.0
    %92 = vmatprep.subr.mxu0 0.0
    %93 = vmatpush1.msra.mxu0 0.0
    %94 = vmatprep.subr.mxu0 0.0
    %95 = vmatpush1.msra.mxu0 0.0
    %96 = vmatprep.subr.mxu0 0.0
    %97 = vmatpush1.msra.mxu0 0.0
    %98 = vmatprep.subr.mxu0 0.0
    %99 = vmatpush1.msra.mxu0 0.0
    %100 = vmatprep.subr.mxu0 0.0
    %101 = vmatpush1.msra.mxu0 0.0
    %102 = vmatprep.subr.mxu0 0.0
    %103 = vmatpush1.msra.mxu0 0.0
    %104 = vmatprep.subr.mxu0 0.0
    %105 = vmatpush1.msra.mxu0 0.0
    %106 = vmatprep.subr.mxu0 0.0
    %107 = vmatpush1.msra.mxu0 0.0
    %108 = vmatprep.subr.mxu0 0.0
    %109 = vmatpush1.msra.mxu0 0.0
    %110 = vmatprep.subr.mxu0 0.0
    %111 = vmatpush1.msra.mxu0 0.0
    %112 = vmatprep.subr.mxu0 0.0
    %113 = vmatpush1.msra.mxu0 0.0
    %114 = vmatprep.subr.mxu0 0.0
    %115 = vmatpush1.msra.mxu0 0.0
    %116 = vmatprep.subr.mxu0 0.0
    %117 = vmatpush1.msra.mxu0 0.0
    %118 = vmatprep.subr.mxu0 0.0
    %119 = vmatpush1.msra.mxu0 0.0
    %120 = vmatprep.subr.mxu0 0.0
    %121 = vmatpush1.msra.mxu0 0.0
    %122 = vmatprep.subr.mxu0 0.0
    %123 = vmatpush1.msra.mxu0 0.0
    %124 = vmatprep.subr.mxu0 0.0
    %125 = vmatpush1.msra.mxu0 0.0
    %126 = vmatprep.subr.mxu0 0.0
    %127 = vmatpush1.msra.mxu0 0.0
    %128 = vmatprep.subr.mxu0 0.0
    %129 = vmatpush1.msra.mxu0 0.0
    %130 = vmatprep.subr.mxu0 0.0
    %131 = vmatpush1.msra.mxu0 0.0
    %132 = vmatprep.subr.mxu0 0.0
    %133 = vmatpush1.msra.mxu0 0.0
    %134 = vmatprep.subr.mxu0 0.0
    %135 = vmatpush1.msra.mxu0 0.0
    %136 = vmatprep.subr.mxu0 0.0
    %137 = vmatpush1.msra.mxu0 0.0
    %138 = vmatprep.subr.mxu0 0.0
    %139 = vmatpush1.msra.mxu0 0.0
    %140 = vmatprep.subr.mxu0 0.0
    %141 = vmatpush1.msra.mxu0 0.0
    %142 = vmatprep.mubr.f32.mxu0 0.0
    %143 = vmatmul.mubr.f32.gmra.mrb[0].mxu0 %v76
    %v144 = vpop.f32.mrb[0].mxu0
    %v145 = vadd.f32 0.0, %v144
    %v146 = vpop.f32.mrb[0].mxu0
    %147 = vdwg.mxu0
    %vm148 = vcmask 130048
    %v150 = vsel %vm148, %v69, 0
    %152 = vmatprep.subr.mxu0 0.0
    %153 = vmatpush1.msra.mxu0 %v70
    %154 = vmatprep.subr.mxu0 0.0
    %155 = vmatpush1.msra.mxu0 %v71
    %156 = vmatprep.subr.mxu0 0.0
    %157 = vmatpush1.msra.mxu0 0.0
    %158 = vmatprep.subr.mxu0 0.0
    %159 = vmatpush1.msra.mxu0 0.0
    %160 = vmatprep.subr.mxu0 0.0
    %161 = vmatpush1.msra.mxu0 0.0
    %162 = vmatprep.subr.mxu0 0.0
    %163 = vmatpush1.msra.mxu0 0.0
    %164 = vmatprep.subr.mxu0 0.0
    %165 = vmatpush1.msra.mxu0 0.0
    %166 = vmatprep.subr.mxu0 0.0
    %167 = vmatpush1.msra.mxu0 0.0
    %168 = vmatprep.subr.mxu0 0.0
    %169 = vmatpush1.msra.mxu0 0.0
    %170 = vmatprep.subr.mxu0 0.0
    %171 = vmatpush1.msra.mxu0 0.0
    %172 = vmatprep.subr.mxu0 0.0
    %173 = vmatpush1.msra.mxu0 0.0
    %174 = vmatprep.subr.mxu0 0.0
    %175 = vmatpush1.msra.mxu0 0.0
    %176 = vmatprep.subr.mxu0 0.0
    %177 = vmatpush1.msra.mxu0 0.0
    %178 = vmatprep.subr.mxu0 0.0
    %179 = vmatpush1.msra.mxu0 0.0
    %180 = vmatprep.subr.mxu0 0.0
    %181 = vmatpush1.msra.mxu0 0.0
    %182 = vmatprep.subr.mxu0 0.0
    %183 = vmatpush1.msra.mxu0 0.0
    %184 = vmatprep.subr.mxu0 0.0
    %185 = vmatpush1.msra.mxu0 0.0
    %186 = vmatprep.subr.mxu0 0.0
    %187 = vmatpush1.msra.mxu0 0.0
    %188 = vmatprep.subr.mxu0 0.0
    %189 = vmatpush1.msra.mxu0 0.0
    %190 = vmatprep.subr.mxu0 0.0
    %191 = vmatpush1.msra.mxu0 0.0
    %192 = vmatprep.subr.mxu0 0.0
    %193 = vmatpush1.msra.mxu0 0.0
    %194 = vmatprep.subr.mxu0 0.0
    %195 = vmatpush1.msra.mxu0 0.0
    %196 = vmatprep.subr.mxu0 0.0
    %197 = vmatpush1.msra.mxu0 0.0
    %198 = vmatprep.subr.mxu0 0.0
    %199 = vmatpush1.msra.mxu0 0.0
    %200 = vmatprep.subr.mxu0 0.0
    %201 = vmatpush1.msra.mxu0 0.0
    %202 = vmatprep.subr.mxu0 0.0
    %203 = vmatpush1.msra.mxu0 0.0
    %204 = vmatprep.subr.mxu0 0.0
    %205 = vmatpush1.msra.mxu0 0.0
    %206 = vmatprep.subr.mxu0 0.0
    %207 = vmatpush1.msra.mxu0 0.0
    %208 = vmatprep.subr.mxu0 0.0
    %209 = vmatpush1.msra.mxu0 0.0
    %210 = vmatprep.subr.mxu0 0.0
    %211 = vmatpush1.msra.mxu0 0.0
    %212 = vmatprep.subr.mxu0 0.0
    %213 = vmatpush1.msra.mxu0 0.0
    %214 = vmatprep.subr.mxu0 0.0
    %215 = vmatpush1.msra.mxu0 0.0
    %216 = vmatprep.mubr.f32.mxu0 0.0
    %217 = vmatmul.mubr.f32.gmra.mrb[0].mxu0 %v150
    %v218 = vpop.f32.mrb[0].mxu0
    %v219 = vadd.f32 %v145, %v218
    %v220 = vpop.f32.mrb[0].mxu0
    %221 = vdwg.mxu0
    %v222 = vld [vmem:[%s4] sm:$0x1]
    %v224 = vlaneseq
    %v225 = vshrl.u32 %v224, 7
    %v226 = vsub.s32 0, %v225
    %v227 = vrot.slane %v222, %v226
    %v229 = vadd.f32 %v219, %v227
    %v230 = vmax.f32 %v229, 0.0
    %v231 = vld [vmem:[%s5] sm:$0xff]
    %v232 = vld [vmem:[%s5 + $0x8] sm:$0xff]
    %v233 = vld [vmem:[%s5 + $0x10] sm:$0xff]
    %v234 = vld [vmem:[%s5 + $0x18] sm:$0xff]
    %v235 = vld [vmem:[%s5 + $0x20] sm:$0xff]
    %v236 = vld [vmem:[%s5 + $0x28] sm:$0xff]
    %v237 = vld [vmem:[%s5 + $0x30] sm:$0xff]
    %v238 = vld [vmem:[%s5 + $0x38] sm:$0xff]
    %v239 = vld [vmem:[%s5 + $0x40] sm:$0xff]
    %v240 = vld [vmem:[%s5 + $0x48] sm:$0xff]
    %v241 = vld [vmem:[%s5 + $0x50] sm:$0xff]
    %v242 = vld [vmem:[%s5 + $0x58] sm:$0xff]
    %v243 = vld [vmem:[%s5 + $0x60] sm:$0xff]
    %v244 = vld [vmem:[%s5 + $0x68] sm:$0xff]
    %v245 = vld [vmem:[%s5 + $0x70] sm:$0xff]
    %v246 = vld [vmem:[%s5 + $0x78] sm:$0xff]
    %v247 = vld [vmem:[%s6] sm:$0x1]
    %v249 = vlaneseq
    %v250 = vshrl.u32 %v249, 7
    %v251 = vsub.s32 0, %v250
    %v252 = vrot.slane %v247, %v251
    %254 = vmatprep.subr.mxu0 0.0
    %255 = vmatpush1.msra.mxu0 %v231
    %256 = vmatprep.subr.mxu0 0.0
    %257 = vmatpush1.msra.mxu0 %v232
    %258 = vmatprep.subr.mxu0 0.0
    %259 = vmatpush1.msra.mxu0 %v233
    %260 = vmatprep.subr.mxu0 0.0
    %261 = vmatpush1.msra.mxu0 %v234
    %262 = vmatprep.subr.mxu0 0.0
    %263 = vmatpush1.msra.mxu0 %v235
    %264 = vmatprep.subr.mxu0 0.0
    %265 = vmatpush1.msra.mxu0 %v236
    %266 = vmatprep.subr.mxu0 0.0
    %267 = vmatpush1.msra.mxu0 %v237
    %268 = vmatprep.subr.mxu0 0.0
    %269 = vmatpush1.msra.mxu0 %v238
    %270 = vmatprep.subr.mxu0 0.0
    %271 = vmatpush1.msra.mxu0 %v239
    %272 = vmatprep.subr.mxu0 0.0
    %273 = vmatpush1.msra.mxu0 %v240
    %274 = vmatprep.subr.mxu0 0.0
    %275 = vmatpush1.msra.mxu0 %v241
    %276 = vmatprep.subr.mxu0 0.0
    %277 = vmatpush1.msra.mxu0 %v242
    %278 = vmatprep.subr.mxu0 0.0
    %279 = vmatpush1.msra.mxu0 %v243
    %280 = vmatprep.subr.mxu0 0.0
    %281 = vmatpush1.msra.mxu0 %v244
    %282 = vmatprep.subr.mxu0 0.0
    %283 = vmatpush1.msra.mxu0 %v245
    %284 = vmatprep.subr.mxu0 0.0
    %285 = vmatpush1.msra.mxu0 %v246
    %286 = vmatprep.subr.mxu0 0.0
    %287 = vmatpush1.msra.mxu0 0.0
    %288 = vmatprep.subr.mxu0 0.0
    %289 = vmatpush1.msra.mxu0 0.0
    %290 = vmatprep.subr.mxu0 0.0
    %291 = vmatpush1.msra.mxu0 0.0
    %292 = vmatprep.subr.mxu0 0.0
    %293 = vmatpush1.msra.mxu0 0.0
    %294 = vmatprep.subr.mxu0 0.0
    %295 = vmatpush1.msra.mxu0 0.0
    %296 = vmatprep.subr.mxu0 0.0
    %297 = vmatpush1.msra.mxu0 0.0
    %298 = vmatprep.subr.mxu0 0.0
    %299 = vmatpush1.msra.mxu0 0.0
    %300 = vmatprep.subr.mxu0 0.0
    %301 = vmatpush1.msra.mxu0 0.0
    %302 = vmatprep.subr.mxu0 0.0
    %303 = vmatpush1.msra.mxu0 0.0
    %304 = vmatprep.subr.mxu0 0.0
    %305 = vmatpush1.msra.mxu0 0.0
    %306 = vmatprep.subr.mxu0 0.0
    %307 = vmatpush1.msra.mxu0 0.0
    %308 = vmatprep.subr.mxu0 0.0
    %309 = vmatpush1.msra.mxu0 0.0
    %310 = vmatprep.subr.mxu0 0.0
    %311 = vmatpush1.msra.mxu0 0.0
    %312 = vmatprep.subr.mxu0 0.0
    %313 = vmatpush1.msra.mxu0 0.0
    %314 = vmatprep.subr.mxu0 0.0
    %315 = vmatpush1.msra.mxu0 0.0
    %316 = vmatprep.subr.mxu0 0.0
    %317 = vmatpush1.msra.mxu0 0.0
    %318 = vmatprep.mubr.f32.mxu0 0.0
    %319 = vmatmul.mubr.f32.gmra.mrb[0].mxu0 %v230
    %v320 = vpop.f32.mrb[0].mxu0
    %v321 = vadd.f32 %v252, %v320
    %v322 = vpop.f32.mrb[0].mxu0
    %323 = vdwg.mxu0
    %v324 = vmax.f32 %v321, 0.0
    %v325 = vld [vmem:[%s7] sm:$0xff]
    %v326 = vld [vmem:[%s7 + $0x8] sm:$0xff]
    %v327 = vld [vmem:[%s7 + $0x10] sm:$0xff]
    %v328 = vld [vmem:[%s7 + $0x18] sm:$0xff]
    %v329 = vld [vmem:[%s7 + $0x20] sm:$0xff]
    %v330 = vld [vmem:[%s7 + $0x28] sm:$0xff]
    %v331 = vld [vmem:[%s7 + $0x30] sm:$0xff]
    %v332 = vld [vmem:[%s7 + $0x38] sm:$0xff]
    %v333 = vld [vmem:[%s7 + $0x40] sm:$0xff]
    %v334 = vld [vmem:[%s7 + $0x48] sm:$0xff]
    %v335 = vld [vmem:[%s7 + $0x50] sm:$0xff]
    %v336 = vld [vmem:[%s7 + $0x58] sm:$0xff]
    %v337 = vld [vmem:[%s7 + $0x60] sm:$0xff]
    %v338 = vld [vmem:[%s7 + $0x68] sm:$0xff]
    %v339 = vld [vmem:[%s7 + $0x70] sm:$0xff]
    %v340 = vld [vmem:[%s7 + $0x78] sm:$0xff]
    %v341 = vld [vmem:[#allocation2] sm:$0x1]
    %v343 = vlaneseq
    %v344 = vshrl.u32 %v343, 7
    %v345 = vsub.s32 0, %v344
    %v346 = vrot.slane %v341, %v345
    %348 = vmatprep.subr.mxu0 0.0
    %349 = vmatpush1.msra.mxu0 %v325
    %350 = vmatprep.subr.mxu0 0.0
    %351 = vmatpush1.msra.mxu0 %v326
    %352 = vmatprep.subr.mxu0 0.0
    %353 = vmatpush1.msra.mxu0 %v327
    %354 = vmatprep.subr.mxu0 0.0
    %355 = vmatpush1.msra.mxu0 %v328
    %356 = vmatprep.subr.mxu0 0.0
    %357 = vmatpush1.msra.mxu0 %v329
    %358 = vmatprep.subr.mxu0 0.0
    %359 = vmatpush1.msra.mxu0 %v330
    %360 = vmatprep.subr.mxu0 0.0
    %361 = vmatpush1.msra.mxu0 %v331
    %362 = vmatprep.subr.mxu0 0.0
    %363 = vmatpush1.msra.mxu0 %v332
    %364 = vmatprep.subr.mxu0 0.0
    %365 = vmatpush1.msra.mxu0 %v333
    %366 = vmatprep.subr.mxu0 0.0
    %367 = vmatpush1.msra.mxu0 %v334
    %368 = vmatprep.subr.mxu0 0.0
    %369 = vmatpush1.msra.mxu0 %v335
    %370 = vmatprep.subr.mxu0 0.0
    %371 = vmatpush1.msra.mxu0 %v336
    %372 = vmatprep.subr.mxu0 0.0
    %373 = vmatpush1.msra.mxu0 %v337
    %374 = vmatprep.subr.mxu0 0.0
    %375 = vmatpush1.msra.mxu0 %v338
    %376 = vmatprep.subr.mxu0 0.0
    %377 = vmatpush1.msra.mxu0 %v339
    %378 = vmatprep.subr.mxu0 0.0
    %379 = vmatpush1.msra.mxu0 %v340
    %380 = vmatprep.subr.mxu0 0.0
    %381 = vmatpush1.msra.mxu0 0.0
    %382 = vmatprep.subr.mxu0 0.0
    %383 = vmatpush1.msra.mxu0 0.0
    %384 = vmatprep.subr.mxu0 0.0
    %385 = vmatpush1.msra.mxu0 0.0
    %386 = vmatprep.subr.mxu0 0.0
    %387 = vmatpush1.msra.mxu0 0.0
    %388 = vmatprep.subr.mxu0 0.0
    %389 = vmatpush1.msra.mxu0 0.0
    %390 = vmatprep.subr.mxu0 0.0
    %391 = vmatpush1.msra.mxu0 0.0
    %392 = vmatprep.subr.mxu0 0.0
    %393 = vmatpush1.msra.mxu0 0.0
    %394 = vmatprep.subr.mxu0 0.0
    %395 = vmatpush1.msra.mxu0 0.0
    %396 = vmatprep.subr.mxu0 0.0
    %397 = vmatpush1.msra.mxu0 0.0
    %398 = vmatprep.subr.mxu0 0.0
    %399 = vmatpush1.msra.mxu0 0.0
    %400 = vmatprep.subr.mxu0 0.0
    %401 = vmatpush1.msra.mxu0 0.0
    %402 = vmatprep.subr.mxu0 0.0
    %403 = vmatpush1.msra.mxu0 0.0
    %404 = vmatprep.subr.mxu0 0.0
    %405 = vmatpush1.msra.mxu0 0.0
    %406 = vmatprep.subr.mxu0 0.0
    %407 = vmatpush1.msra.mxu0 0.0
    %408 = vmatprep.subr.mxu0 0.0
    %409 = vmatpush1.msra.mxu0 0.0
    %410 = vmatprep.subr.mxu0 0.0
    %411 = vmatpush1.msra.mxu0 0.0
    %412 = vmatprep.mubr.f32.mxu0 0.0
    %413 = vmatmul.mubr.f32.gmra.mrb[0].mxu0 %v324
    %v414 = vpop.f32.mrb[0].mxu0
    %v415 = vadd.f32 %v346, %v414
    %v416 = vpop.f32.mrb[0].mxu0
    %417 = vdwg.mxu0
    %vm418 = vcmask 7168
    %419 = vst.msk [vmem:[%s9] sm:$0xff] %vm418, %v415
    // Predicated region
    $region50: #{critic_forward.1} parent=1 // pred_check
      _
    $region51: #{critic_forward.1} parent=1 // pred_check_branch
      %421 = sbr.rel (0) target = $region53
    $region52: #{critic_forward.1} parent=1 // pred_region
      _
    $region53: #{critic_forward.1} parent=1 // pred_fallthru
      _
    // Predicated region
    $region54: #{critic_forward.1} parent=1 // pred_check
      _
    $region55: #{critic_forward.1} parent=1 // pred_check_branch
      %423 = sbr.rel (0) target = $region57
    $region56: #{critic_forward.1} parent=1 // pred_region
      _
    $region57: #{critic_forward.1} parent=1 // pred_fallthru
      _
    %424 = vsyncpa [#allocation4], 1
    %425 = vsyncpa [#allocation6], 1

</llo_original>
